<compile_context>
chip_gen: v7x
topology: tpu7x:2x2x1
jax: 0.10.0
libtpu: 0.0.40
codegen_flags: <defaults>
</compile_context>

<pallas_src>
import functools

import jax
import jax.numpy as jnp
import numpy as np
from jax.experimental import pallas as pl
from jax.experimental.pallas import tpu as pltpu


# ----------------------------- Pallas kernel ------------------------------

def _rmsnorm_kernel(x_ref, w_ref, o_ref, *, eps):
    # x_ref: (tm, dim)   w_ref: (1, dim)   o_ref: (tm, dim)
    x = x_ref[...].astype(jnp.float32)
    ms = jnp.mean(x * x, axis=-1, keepdims=True)           # (tm, 1)
    normed = x * jax.lax.rsqrt(ms + eps)                    # rsqrt -> EUP slot
    w = w_ref[...].astype(jnp.float32)                      # (1, dim), broadcast
    o_ref[...] = (normed * w).astype(o_ref.dtype)           # single downcast


# ----------------------------- tile sizing ---------------------------------

def _default_vmem_limit_bytes() -> int:
    """Explicit scoped-VMEM limit, co-tuned with the row tile."""
    try:
        cap = int(pltpu.get_tpu_info().vmem_capacity_bytes)
        return min((cap * 3) // 4, 96 << 20)      # ~96 MiB on v5e/v6e, ~48 on v7x
    except Exception:
        # Conservative fallback: safe on v7x (64 MiB / TC) and v5e/v6e (128 MiB).
        return 48 << 20


def _pick_row_tile(M: int, dim: int, itemsize: int, vmem_limit_bytes: int) -> int:
    """Largest legal row tile that fits the VMEM budget (double-buffered in+out)."""
    # dtype-native sublane multiple: 8 (f32), 16 (bf16), 32 (int8/fp8).
    sub = max(8, 32 // max(1, itemsize))
    # Streamed per-row bytes: x block + out block, each double-buffered.
    bytes_per_row = 2 * 2 * dim * itemsize
    budget = int(vmem_limit_bytes * 0.6)          # headroom for weight + scratch
    tm = budget // max(1, bytes_per_row)
    tm = min(tm, 4096)                            # diminishing returns past this
    tm = (tm // sub) * sub
    if tm <= 0 or tm >= M:
        return M                                  # full-extent block is always legal
    return max(sub, tm)


# ----------------------------- wrapper --------------------------------------

def rms_norm(x: jax.Array, weight: jax.Array, eps: float = 1e-6,
             max_block_rows: int | None = None) -> jax.Array:
    """RMSNorm over the last axis of x, scaled by `weight` (shape (dim,))."""
    orig_shape = x.shape
    dim = orig_shape[-1]
    x2d = x.reshape(-1, dim)
    M = x2d.shape[0]

    vmem_limit = _default_vmem_limit_bytes()
    tm = _pick_row_tile(M, dim, jnp.dtype(x.dtype).itemsize, vmem_limit)
    if max_block_rows is not None:
        tm = max(1, min(tm, max_block_rows))

    num_blocks = pl.cdiv(M, tm)                   # no padding; partial last block OK
    w2d = weight.reshape(1, dim)

    kernel = functools.partial(_rmsnorm_kernel, eps=eps)
    y2d = pl.pallas_call(
        kernel,
        out_shape=jax.ShapeDtypeStruct((M, dim), x.dtype),
        grid=(num_blocks,),
        in_specs=[
            pl.BlockSpec((tm, dim), lambda i: (i, 0)),
            pl.BlockSpec((1, dim), lambda i: (0, 0)),   # resident weight block
        ],
        out_specs=pl.BlockSpec((tm, dim), lambda i: (i, 0)),
        compiler_params=pltpu.CompilerParams(
            dimension_semantics=("parallel",),          # megacore row sharding
            vmem_limit_bytes=vmem_limit,
        ),
    )(x2d, w2d)

    return y2d.reshape(orig_shape)


# -------------------------- pure-JAX reference -----------------------------

def rms_norm_reference(x, weight, eps=1e-6):
    xf = x.astype(jnp.float32)
    normed = xf * jax.lax.rsqrt(jnp.mean(xf * xf, axis=-1, keepdims=True) + eps)
    return (normed * weight.astype(jnp.float32)).astype(x.dtype)


# --------------------------------- main ------------------------------------

if __name__ == "__main__":
    key = jax.random.PRNGKey(0)
    kx, kw = jax.random.split(key)

    # Primary small test: (bsz=2, seqlen=8, dim=128) -> lane-dense feature axis.
    bsz, seqlen, dim = 2, 8, 128
    x = jax.random.normal(kx, (bsz, seqlen, dim), dtype=jnp.float32)
    weight = 1.0 + 0.1 * jax.random.normal(kw, (dim,), dtype=jnp.float32)

    y = jax.block_until_ready(rms_norm(x, weight))
    y_ref = rms_norm_reference(x, weight)
    assert np.allclose(np.asarray(y), np.asarray(y_ref), atol=1e-5, rtol=1e-5), (
        "Pallas RMSNorm mismatch vs reference (divisible case)"
    )

    # Secondary test: row count not divisible by the tile -> exercises the
    # no-pad partial-last-block path (M=21 rows, tm=8, grid=3).
    x3 = jax.random.normal(kx, (3, 7, dim), dtype=jnp.float32)
    y3 = jax.block_until_ready(rms_norm(x3, weight, max_block_rows=8))
    y3_ref = rms_norm_reference(x3, weight)
    assert np.allclose(np.asarray(y3), np.asarray(y3_ref), atol=1e-5, rtol=1e-5), (
        "Pallas RMSNorm mismatch vs reference (partial-block case)"
    )

    print("KERNEL_OK")
</pallas_src>

<mosaic_0001>
module attributes {stable_mosaic.version = 11 : i64} {
  func.func @_rmsnorm_kernel(%arg0: i32, %arg1: memref<16x128xf32, #tpu.memory_space<vmem>>, %arg2: memref<1x128xf32, #tpu.memory_space<vmem>>, %arg3: memref<16x128xf32, #tpu.memory_space<vmem>>) attributes {dimension_semantics = [#tpu.dimension_semantics<parallel>], iteration_bounds = array<i64: 1>, scalar_prefetch = 0 : i64, scratch_operands = 0 : i64, tpu.core_type = #tpu.core_type<tc>, window_params = [{transform_indices = @transform_0, window_bounds = array<i64: 16, 128>}, {pipeline_mode = #tpu.pipeline_mode<synchronous>, transform_indices = @transform_1, window_bounds = array<i64: 1, 128>}, {transform_indices = @transform_2, window_bounds = array<i64: 16, 128>}]} {
    %c0 = arith.constant 0 : index
    %c0_0 = arith.constant 0 : index
    %0 = vector.load %arg1[%c0, %c0_0] : memref<16x128xf32, #tpu.memory_space<vmem>>, vector<16x128xf32>
    %1 = arith.mulf %0, %0 : vector<16x128xf32>
    %cst = arith.constant dense<0.000000e+00> : vector<16xf32>
    %2 = vector.multi_reduction <add>, %1, %cst [1] : vector<16x128xf32> to vector<16xf32>
    %3 = vector.shape_cast %2 : vector<16xf32> to vector<16x1xf32>
    %cst_1 = arith.constant 1.280000e+02 : f32
    %4 = vector.broadcast %cst_1 : f32 to vector<16x1xf32>
    %5 = arith.divf %3, %4 : vector<16x1xf32>
    %cst_2 = arith.constant 9.99999997E-7 : f32
    %6 = vector.broadcast %cst_2 : f32 to vector<16x1xf32>
    %7 = arith.addf %5, %6 : vector<16x1xf32>
    %8 = math.rsqrt %7 : vector<16x1xf32>
    %9 = vector.broadcast %8 : vector<16x1xf32> to vector<16x128xf32>
    %10 = arith.mulf %0, %9 : vector<16x128xf32>
    %c0_3 = arith.constant 0 : index
    %c0_4 = arith.constant 0 : index
    %11 = vector.load %arg2[%c0_3, %c0_4] : memref<1x128xf32, #tpu.memory_space<vmem>>, vector<1x128xf32>
    %12 = vector.broadcast %11 : vector<1x128xf32> to vector<16x128xf32>
    %13 = arith.mulf %10, %12 : vector<16x128xf32>
    %c0_5 = arith.constant 0 : index
    %c0_6 = arith.constant 0 : index
    %14 = vector.load %arg3[%c0_5, %c0_6] : memref<16x128xf32, #tpu.memory_space<vmem>>, vector<16x128xf32>
    tpu.vector_store %arg3[%c0_5, %c0_6], %13 {strides = array<i32>} : memref<16x128xf32, #tpu.memory_space<vmem>>, vector<16x128xf32>,
    return
  }
  func.func @transform_0(%arg0: i32) -> (i32, i32) {
    %c0_i32 = arith.constant 0 : i32
    %c0_i32_0 = arith.constant 0 : i32
    return %arg0, %c0_i32 : i32, i32
  }
  func.func @transform_1(%arg0: i32) -> (i32, i32) {
    %c0_i32 = arith.constant 0 : i32
    %c0_i32_0 = arith.constant 0 : i32
    %c0_i32_1 = arith.constant 0 : i32
    return %c0_i32, %c0_i32_0 : i32, i32
  }
  func.func @transform_2(%arg0: i32) -> (i32, i32) {
    %c0_i32 = arith.constant 0 : i32
    %c0_i32_0 = arith.constant 0 : i32
    return %arg0, %c0_i32 : i32, i32
  }
}

</mosaic_0001>

<llo_original>
// kernel: tpu_custom_call.1
$region0: #{tpu_custom_call.1}
  #allocation0 [shape = 'u32[]', space=smem, size = 0x4, offset = 0x4, fixed_abs, tag = 'smem constant byte address 0x4 - core index']
  #allocation1 [shape = 'u32[144,128]{1,0:T(1,128)}', space=vmem, size = 0x12000, scoped, tag = 'internal scratch']
  %s0 = inlined_call_operand.hbm [shape: f32[16,128], index: 0, kind: input, shape index: {}]
  %s1 = inlined_call_operand.vmem [shape: f32[1,128], index: 1, kind: input, shape index: {}]
  %s2 = inlined_call_operand.hbm [shape: f32[16,128], index: 2, kind: output, shape index: {}]
  %s3 = sld [smem:[#allocation0]]
  $region22: #{tpu_custom_call.1} parent=0
    _
  %s5 = ssub.s32 1, %s3
  %s6 = scalar_select 0, %s5, %s3
  $region1: #{tpu_custom_call.1} parent=0
    #allocation2 [shape = 'u8[8192]{0}', space=vmem, size = 0x2000, scoped, tag = 'input window, operand 0, single buffered']
    #allocation3 [shape = 's32[1]{0}', space=sflag, size = 0x4, scoped, tag = 'scoped memory for tpu_custom_call.1']
    #allocation4 [shape = 's32[1]{0}', space=sflag, size = 0x4, scoped, tag = 'scoped memory for tpu_custom_call.1']
    #allocation5 [shape = 'u8[8192]{0}', space=vmem, size = 0x2000, scoped, tag = 'output window, operand 0, single buffered']
    %7 = vsyncpa [#allocation3], 0
    %8 = vsyncpa [#allocation4], 0
    // Predicated region
    $region2: #{tpu_custom_call.1} parent=1 // pred_check
      _
    $region3: #{tpu_custom_call.1} parent=1 // pred_check_branch
      %10 = sbr.rel (0) target = $region5
    $region4: #{tpu_custom_call.1} parent=1 // pred_region
      %s12 = ssub.s32 256, 256
      %13 = vsyncadd [#allocation3], %s12
      %s14 = sshll.u32 [#allocation2], 4
      %s15 = int_to_ptr.vmem [resolvable:$true] %s14
      %20 = dma.hbm_to_vmem [thread:$0]  %s0, 256, %s15, [#allocation3], 128, 128, 8
    $region5: #{tpu_custom_call.1} parent=1 // pred_fallthru
      _
    // Predicated region
    $region6: #{tpu_custom_call.1} parent=1 // pred_check
      _
    $region7: #{tpu_custom_call.1} parent=1 // pred_check_branch
      %22 = sbr.rel (0) target = $region9
    $region8: #{tpu_custom_call.1} parent=1 // pred_region
      _
    $region9: #{tpu_custom_call.1} parent=1 // pred_fallthru
      _
    // Predicated region
    $region10: #{tpu_custom_call.1} parent=1 // pred_check
      _
    $region11: #{tpu_custom_call.1} parent=1 // pred_check_branch
      %24 = sbr.rel (0) target = $region13
    $region12: #{tpu_custom_call.1} parent=1 // pred_region
      %25 = dma.done [#allocation3], 256
    $region13: #{tpu_custom_call.1} parent=1 // pred_fallthru
      _
    %v26 = vld [vmem:[#allocation2] sm:$0xff]
    %v27 = vld [vmem:[#allocation2 + $0x8] sm:$0xff]
    %v28 = vmul.f32 %v26, %v26
    %v29 = vmul.f32 %v27, %v27
    %30 = vadd.xlane.f32.xlu0 %v28
    %v31 = vpop.xlane.xlu0 %30
    %32 = vadd.xlane.f32.xlu0 %v29
    %v33 = vpop.xlane.xlu0 %32
    %v34 = vrcp.pop 128.0
    %v35 = vmul.f32 %v31, %v34
    %v36 = vmul.f32 %v33, %v34
    %v37 = vadd.f32 %v35, 1e-06
    %v38 = vadd.f32 %v36, 1e-06
    %v39 = vrsqrt.pop %v37
    %v40 = vrsqrt.pop %v38
    %v41 = vmul.f32 %v26, %v39
    %v42 = vmul.f32 %v27, %v40
    %v43 = vld [vmem:[%s1] sm:$0x1]
    %v45 = vlaneseq
    %v46 = vshrl.u32 %v45, 7
    %v47 = vsub.s32 0, %v46
    %v48 = vrot.slane %v43, %v47
    %v50 = vmul.f32 %v41, %v48
    %v51 = vmul.f32 %v42, %v48
    %52 = vst [vmem:[#allocation5] sm:$0xff] %v50
    %53 = vst [vmem:[#allocation5 + $0x8] sm:$0xff] %v51
    // Predicated region
    $region14: #{tpu_custom_call.1} parent=1 // pred_check
      _
    $region15: #{tpu_custom_call.1} parent=1 // pred_check_branch
      %55 = sbr.rel (0) target = $region17
    $region16: #{tpu_custom_call.1} parent=1 // pred_region
      %s57 = ssub.s32 256, 256
      %58 = vsyncadd [#allocation4], %s57
      %s59 = sshll.u32 [#allocation5], 4
      %s60 = int_to_ptr.vmem [resolvable:$true] %s59
      %65 = dma.vmem_to_hbm [thread:$0]  %s60, 256, %s2, [#allocation4], 128, 128, 8
    $region17: #{tpu_custom_call.1} parent=1 // pred_fallthru
      _
    // Predicated region
    $region18: #{tpu_custom_call.1} parent=1 // pred_check
      _
    $region19: #{tpu_custom_call.1} parent=1 // pred_check_branch
      %67 = sbr.rel (0) target = $region21
    $region20: #{tpu_custom_call.1} parent=1 // pred_region
      %68 = dma.done [#allocation4], 256
    $region21: #{tpu_custom_call.1} parent=1 // pred_fallthru
      _
    %69 = vsyncpa [#allocation3], 1
    %70 = vsyncpa [#allocation4], 1

</llo_original>
